<compile_context>
chip_gen: v6e
topology: v6e:2x2x1
jax: 0.10.0
libtpu: 0.0.40
codegen_flags: <defaults>
</compile_context>

<pallas_src>
import functools

import jax
import jax.numpy as jnp
import numpy as np
from jax.experimental import pallas as pl
from jax.experimental.pallas import tpu as pltpu


def _round_up(a: int, b: int) -> int:
    return (a + b - 1) // b * b


def _sublane_multiple(dtype) -> int:
    # f32 -> 8, bf16 -> 16, int8/fp8 -> 32 rows per sublane tile.
    return 8 * max(1, 4 // jnp.dtype(dtype).itemsize)


def _make_sum_mean_kernel(read_op, num_graphs, tn, n_valid, mask_tail):
    """Segment sum / mean via a [G,TN] one-hot MXU contraction, tiled over N (and D)."""

    def kernel(b_ref, x_ref, out_ref, acc_ref, *rest):
        cnt_ref = rest[0] if read_op == "mean" else None
        ni = pl.program_id(1)                      # N (reduction) axis, innermost

        @pl.when(ni == 0)
        def _init():
            acc_ref[...] = jnp.zeros_like(acc_ref)
            if cnt_ref is not None:
                cnt_ref[...] = jnp.zeros_like(cnt_ref)

        b = b_ref[...]                             # [1, TN] int32 ids (lane-major)
        x = x_ref[...]                             # [TN, DT] node features

        if mask_tail:
            # Partial last tile: rows >= n_valid hold stale VMEM (possibly
            # NaN/Inf).  Select them to zero before the matmul (0*NaN = NaN!).
            row = jax.lax.broadcasted_iota(jnp.int32, (tn, 1), 0) + ni * tn
            x = jnp.where(row < n_valid, x, jnp.array(0, x.dtype))

        # One-hot built directly in [G, TN] layout -> no XLU transpose pre-MXU.
        seg_ids = jax.lax.broadcasted_iota(jnp.int32, (num_graphs, tn), 0)
        onehot = (seg_ids == b).astype(x.dtype)    # [G, TN]; padded ids match nothing

        # Scatter-add as a canonical [G,TN] x [TN,DT] matmul, accumulated in f32.
        acc_ref[...] += jnp.dot(onehot, x, preferred_element_type=jnp.float32)

        if cnt_ref is not None:
            # Counts from the same one-hot via a tiny ones-column MXU
            # contraction (exact f32 accumulation, no second elementwise pass).
            ones_col = jnp.ones((tn, 1), dtype=x.dtype)
            cnt_ref[...] += jnp.dot(onehot, ones_col,
                                    preferred_element_type=jnp.float32)

        @pl.when(ni == pl.num_programs(1) - 1)
        def _finalize():
            res = acc_ref[...]
            if cnt_ref is not None:
                res = res / jnp.maximum(cnt_ref[...], 1.0)
            out_ref[...] = res.astype(out_ref.dtype)   # single lane-dense store

    return kernel


def _make_max_kernel(num_graphs, tn):
    """Segment max via scalar-prefetched sorted-segment offsets, tiled over N (and D)."""

    def kernel(off_ref, x_ref, out_ref, acc_ref):
        ni = pl.program_id(1)

        @pl.when(ni == 0)
        def _init():
            acc_ref[...] = jnp.full_like(acc_ref, -jnp.inf)

        x = x_ref[...]                                  # [TN, DT], native dtype
        neg = jnp.array(-jnp.inf, x.dtype)
        row = jax.lax.broadcasted_iota(jnp.int32, (tn, 1), 0)   # hoisted once
        tile_start = ni * tn

        for g in range(num_graphs):                     # static, small G
            lo = jnp.maximum(off_ref[g] - tile_start, 0)
            hi = jnp.minimum(off_ref[g + 1] - tile_start, tn)

            @pl.when(hi > lo)                           # skip segments not in tile
            def _update(g=g, lo=lo, hi=hi):
                mask = (row >= lo) & (row < hi)         # [TN, 1]
                seg_max = jnp.max(jnp.where(mask, x, neg), axis=0,
                                  keepdims=True)        # [1, DT]
                acc_ref[g:g + 1, :] = jnp.maximum(acc_ref[g:g + 1, :],
                                                  seg_max.astype(jnp.float32))

        @pl.when(ni == pl.num_programs(1) - 1)
        def _finalize():
            acc = acc_ref[...]
            # Empty graphs -> 0 (torch scatter(reduce='max') semantics); note
            # this also rewrites a legitimately all -inf segment to 0.
            out_ref[...] = jnp.where(acc == -jnp.inf, jnp.zeros_like(acc),
                                     acc).astype(out_ref.dtype)

    return kernel


@functools.partial(jax.jit, static_argnames=("num_graphs", "read_op", "tile_n"))
def global_readout(x, batch, num_graphs, read_op="sum", tile_n=None):
    """Pallas equivalent of GlobalReadout.forward for sum/mean/max read ops.

    x:     [N, D] float node features
    batch: [N]    int graph id per node (values in [0, num_graphs)); must be
                  sorted (PyG convention) for read_op == 'max'.
    returns [num_graphs, D]
    """
    if read_op not in ("sum", "mean", "max"):
        raise ValueError(f"unsupported read_op: {read_op}")

    n, d = x.shape
    batch = batch.astype(jnp.int32)
    itemsize = jnp.dtype(x.dtype).itemsize

    # ---- D tiling: a "parallel" feature axis so v7x megacore can split it.
    if d >= 256 and d % 128 == 0:
        d_tile = 256 if d % 256 == 0 else 128
    else:
        d_tile = d
    d_blocks = d // d_tile

    # ---- N tiling: target ~2 MiB of x per buffer (kernel is HBM-bound).
    if tile_n is None:
        t = (2 * 1024 * 1024) // max(d_tile * itemsize, 1)
        t = max(256, min(2048, t))
        tile_n = max(128, (t // 128) * 128)

    if n <= tile_n:
        # Single tile: round rows up to the dtype's sublane multiple; pad x by
        # the tiny remainder so the block stays aligned (negligible cost).
        tn = _round_up(max(n, 1), _sublane_multiple(x.dtype))
        n_blocks = 1
        mask_tail = False
        if tn > n:
            x = jnp.pad(x, ((0, tn - n), (0, 0)))
    else:
        assert tile_n % 128 == 0, "tile_n must be a multiple of 128"
        tn = tile_n
        n_blocks = (n + tn - 1) // tn
        mask_tail = (n % tn) != 0           # mask stale rows of the last tile
        # NOTE: x is deliberately NOT padded here (no extra HBM round trip).

    n_pad = n_blocks * tn
    grid = (d_blocks, n_blocks)             # N (reduction) axis innermost
    dim_sem = ("parallel", "arbitrary")

    # Rough VMEM budget: double-buffered inputs/outputs + resident accumulator.
    g_pad = _round_up(num_graphs, 8)
    est = (2 * tn * d_tile * itemsize               # x tiles (double-buffered)
           + 2 * 8 * tn * 4                         # id tiles (sublane-padded)
           + 2 * g_pad * max(d_tile, 128) * itemsize    # out block
           + 2 * g_pad * max(d_tile, 128) * 4           # acc (+cnt) scratch
           + (1 << 20))
    vmem_limit = int(min(100 * 1024 * 1024, max(32 * 1024 * 1024, 2 * est)))
    cparams = pltpu.CompilerParams(dimension_semantics=dim_sem,
                                   vmem_limit_bytes=vmem_limit)
    out_shape = jax.ShapeDtypeStruct((num_graphs, d), x.dtype)

    if read_op in ("sum", "mean"):
        # Batch ids travel lane-major [1, n_pad]; padded rows get id ==
        # num_graphs so they match no graph (keeps mean counts exact).
        if n_pad > n:
            batch = jnp.pad(batch, (0, n_pad - n), constant_values=num_graphs)
        b2 = batch.reshape(1, n_pad)

        kernel = _make_sum_mean_kernel(read_op, num_graphs, tn, n, mask_tail)
        scratch = [pltpu.VMEM((num_graphs, d_tile), jnp.float32)]
        if read_op == "mean":
            scratch.append(pltpu.VMEM((num_graphs, 1), jnp.float32))

        return pl.pallas_call(
            kernel,
            out_shape=out_shape,
            grid=grid,
            in_specs=[
                pl.BlockSpec((1, tn), lambda j, i: (0, i)),        # graph ids
                pl.BlockSpec((tn, d_tile), lambda j, i: (i, j)),   # features
            ],
            out_specs=pl.BlockSpec((num_graphs, d_tile), lambda j, i: (0, j)),
            scratch_shapes=scratch,
            compiler_params=cparams,
        )(b2, x)

    # ---- read_op == "max": scalar-prefetch per-graph row offsets (sorted
    # PyG batch) into SMEM; no per-node id tensor is shipped at all.
    offsets = jnp.searchsorted(
        batch, jnp.arange(num_graphs + 1, dtype=jnp.int32)).astype(jnp.int32)

    kernel = _make_max_kernel(num_graphs, tn)
    grid_spec = pltpu.PrefetchScalarGridSpec(
        num_scalar_prefetch=1,
        grid=grid,
        in_specs=[pl.BlockSpec((tn, d_tile), lambda j, i, off: (i, j))],
        out_specs=pl.BlockSpec((num_graphs, d_tile), lambda j, i, off: (0, j)),
        scratch_shapes=[pltpu.VMEM((num_graphs, d_tile), jnp.float32)],
    )
    return pl.pallas_call(
        kernel,
        out_shape=out_shape,
        grid_spec=grid_spec,
        compiler_params=cparams,
    )(offsets, x)


if __name__ == "__main__":
    key = jax.random.PRNGKey(0)

    # N nodes, D features, G graphs (sorted PyG-style batch vector).
    N, D, G = 300, 64, 5
    x = jax.random.normal(key, (N, D), dtype=jnp.float32)
    sizes = [70, 50, 90, 40, 50]
    batch = jnp.concatenate(
        [jnp.full((s,), g, dtype=jnp.int32) for g, s in enumerate(sizes)])

    # Pure-JAX references (global_add/mean/max_pool semantics).
    ref_sum = jax.ops.segment_sum(x, batch, num_segments=G)
    counts = jax.ops.segment_sum(jnp.ones((N, 1), jnp.float32), batch,
                                 num_segments=G)
    ref_mean = ref_sum / jnp.maximum(counts, 1.0)
    ref_max = jnp.where(counts > 0,
                        jax.ops.segment_max(x, batch, num_segments=G), 0.0)

    # --- multi-tile path: tile_n=128 -> 3 N tiles, last one partial ---
    out_sum = jax.block_until_ready(global_readout(x, batch, G, "sum", tile_n=128))
    out_mean = jax.block_until_ready(global_readout(x, batch, G, "mean", tile_n=128))
    out_max = jax.block_until_ready(global_readout(x, batch, G, "max", tile_n=128))
    np.testing.assert_allclose(np.asarray(out_sum), np.asarray(ref_sum), rtol=1e-4, atol=1e-4)
    np.testing.assert_allclose(np.asarray(out_mean), np.asarray(ref_mean), rtol=1e-4, atol=1e-4)
    np.testing.assert_allclose(np.asarray(out_max), np.asarray(ref_max), rtol=1e-4, atol=1e-4)

    # --- auto-tiled (single-tile) path with the default tile_n ---
    out_sum_auto = jax.block_until_ready(global_readout(x, batch, G, "sum"))
    out_max_auto = jax.block_until_ready(global_readout(x, batch, G, "max"))
    np.testing.assert_allclose(np.asarray(out_sum_auto), np.asarray(ref_sum), rtol=1e-4, atol=1e-4)
    np.testing.assert_allclose(np.asarray(out_max_auto), np.asarray(ref_max), rtol=1e-4, atol=1e-4)

    # --- empty trailing graph (G=6): mean -> 0 row, max -> 0 row ---
    G6 = 6
    ref_sum6 = jax.ops.segment_sum(x, batch, num_segments=G6)
    counts6 = jax.ops.segment_sum(jnp.ones((N, 1), jnp.float32), batch, num_segments=G6)
    ref_mean6 = ref_sum6 / jnp.maximum(counts6, 1.0)
    ref_max6 = jnp.where(counts6 > 0,
                         jax.ops.segment_max(x, batch, num_segments=G6), 0.0)
    out_mean6 = jax.block_until_ready(global_readout(x, batch, G6, "mean", tile_n=128))
    out_max6 = jax.block_until_ready(global_readout(x, batch, G6, "max", tile_n=128))
    np.testing.assert_allclose(np.asarray(out_mean6), np.asarray(ref_mean6), rtol=1e-4, atol=1e-4)
    np.testing.assert_allclose(np.asarray(out_max6), np.asarray(ref_max6), rtol=1e-4, atol=1e-4)

    # --- tiny aligned single-tile path ---
    x_small = jax.random.normal(jax.random.PRNGKey(1), (16, 32), jnp.float32)
    b_small = jnp.array([0] * 5 + [1] * 6 + [2] * 5, dtype=jnp.int32)
    out_small = jax.block_until_ready(global_readout(x_small, b_small, 3, "sum"))
    ref_small = jax.ops.segment_sum(x_small, b_small, num_segments=3)
    np.testing.assert_allclose(np.asarray(out_small), np.asarray(ref_small), rtol=1e-4, atol=1e-4)

    print("KERNEL_OK")
</pallas_src>

<mosaic_0001>
module attributes {stable_mosaic.version = 11 : i64} {
  func.func @kernel(%arg0: i32, %arg1: i32, %arg2: memref<1x128xi32, #tpu.memory_space<vmem>>, %arg3: memref<128x64xf32, #tpu.memory_space<vmem>>, %arg4: memref<5x64xf32, #tpu.memory_space<vmem>>, %arg5: memref<5x64xf32, #tpu.memory_space<vmem>>) attributes {dimension_semantics = [#tpu.dimension_semantics<parallel>, #tpu.dimension_semantics<arbitrary>], iteration_bounds = array<i64: 1, 3>, scalar_prefetch = 0 : i64, scratch_operands = 1 : i64, tpu.core_type = #tpu.core_type<tc>, window_params = [{transform_indices = @transform_0, window_bounds = array<i64: 1, 128>}, {transform_indices = @transform_1, window_bounds = array<i64: 128, 64>}, {transform_indices = @transform_2, window_bounds = array<i64: 5, 64>}]} {
    %c0_i32 = arith.constant 0 : i32
    %0 = arith.cmpi eq, %arg1, %c0_i32 : i32
    %1 = arith.extui %0 : i1 to i32
    %c0_i32_0 = arith.constant 0 : i32
    %2 = arith.cmpi ne, %1, %c0_i32_0 : i32
    scf.if %2 {
      %cst_10 = arith.constant 0.000000e+00 : f32
      %27 = vector.broadcast %cst_10 : f32 to vector<5x64xf32>
      %c0_11 = arith.constant 0 : index
      %c0_12 = arith.constant 0 : index
      %28 = vector.load %arg5[%c0_11, %c0_12] : memref<5x64xf32, #tpu.memory_space<vmem>>, vector<5x64xf32>
      tpu.vector_store %arg5[%c0_11, %c0_12], %27 {strides = array<i32>} : memref<5x64xf32, #tpu.memory_space<vmem>>, vector<5x64xf32>,
    } else {
    }
    %c0 = arith.constant 0 : index
    %c0_1 = arith.constant 0 : index
    %3 = vector.load %arg2[%c0, %c0_1] : memref<1x128xi32, #tpu.memory_space<vmem>>, vector<1x128xi32>
    %c0_2 = arith.constant 0 : index
    %c0_3 = arith.constant 0 : index
    %4 = vector.load %arg3[%c0_2, %c0_3] : memref<128x64xf32, #tpu.memory_space<vmem>>, vector<128x64xf32>
    %5 = tpu.iota {dimensions = array<i32: 0>} : vector<128x1xi32>
    %c128_i32 = arith.constant 128 : i32
    %6 = arith.muli %arg1, %c128_i32 : i32
    %7 = vector.broadcast %6 : i32 to vector<128x1xi32>
    %8 = arith.addi %5, %7 : vector<128x1xi32>
    %c300_i32 = arith.constant 300 : i32
    %9 = vector.broadcast %c300_i32 : i32 to vector<128x1xi32>
    %10 = arith.cmpi slt, %8, %9 : vector<128x1xi32>
    %cst = arith.constant 0.000000e+00 : f32
    %11 = vector.shape_cast %10 : vector<128x1xi1> to vector<128x1xi1>
    %12 = vector.broadcast %11 : vector<128x1xi1> to vector<128x64xi1>
    %13 = vector.broadcast %cst : f32 to vector<128x64xf32>
    %14 = arith.select %12, %4, %13 : vector<128x64xi1>, vector<128x64xf32>
    %15 = tpu.iota {dimensions = array<i32: 0>} : vector<5x128xi32>
    %16 = vector.broadcast %3 : vector<1x128xi32> to vector<5x128xi32>
    %17 = arith.cmpi eq, %15, %16 : vector<5x128xi32>
    %18 = arith.extui %17 : vector<5x128xi1> to vector<5x128xi32>
    %19 = arith.sitofp %18 : vector<5x128xi32> to vector<5x128xf32>
    %c0_4 = arith.constant 0 : index
    %c0_5 = arith.constant 0 : index
    %20 = vector.load %arg5[%c0_4, %c0_5] : memref<5x64xf32, #tpu.memory_space<vmem>>, vector<5x64xf32>
    %cst_6 = arith.constant dense<0.000000e+00> : vector<5x64xf32>
    %21 = tpu.matmul %19, %14, %cst_6 {dimension_numbers = #tpu.dot_dimension_numbers<[1], [0], [0], [1], [0, 0, 1, 1], [], []>} : vector<5x128xf32>, vector<128x64xf32>, vector<5x64xf32> -> vector<5x64xf32>
    %22 = arith.addf %20, %21 : vector<5x64xf32>
    %c0_7 = arith.constant 0 : index
    %c0_8 = arith.constant 0 : index
    %23 = vector.load %arg5[%c0_7, %c0_8] : memref<5x64xf32, #tpu.memory_space<vmem>>, vector<5x64xf32>
    tpu.vector_store %arg5[%c0_7, %c0_8], %22 {strides = array<i32>} : memref<5x64xf32, #tpu.memory_space<vmem>>, vector<5x64xf32>,
    %c2_i32 = arith.constant 2 : i32
    %24 = arith.cmpi eq, %arg1, %c2_i32 : i32
    %25 = arith.extui %24 : i1 to i32
    %c0_i32_9 = arith.constant 0 : i32
    %26 = arith.cmpi ne, %25, %c0_i32_9 : i32
    scf.if %26 {
      %c0_10 = arith.constant 0 : index
      %c0_11 = arith.constant 0 : index
      %27 = vector.load %arg5[%c0_10, %c0_11] : memref<5x64xf32, #tpu.memory_space<vmem>>, vector<5x64xf32>
      %c0_12 = arith.constant 0 : index
      %c0_13 = arith.constant 0 : index
      %28 = vector.load %arg4[%c0_12, %c0_13] : memref<5x64xf32, #tpu.memory_space<vmem>>, vector<5x64xf32>
      tpu.vector_store %arg4[%c0_12, %c0_13], %27 {strides = array<i32>} : memref<5x64xf32, #tpu.memory_space<vmem>>, vector<5x64xf32>,
    } else {
    }
    return
  }
  func.func @transform_0(%arg0: i32, %arg1: i32) -> (i32, i32) {
    %c0_i32 = arith.constant 0 : i32
    %c0_i32_0 = arith.constant 0 : i32
    return %c0_i32, %arg1 : i32, i32
  }
  func.func @transform_1(%arg0: i32, %arg1: i32) -> (i32, i32) {
    %c0_i32 = arith.constant 0 : i32
    return %arg1, %arg0 : i32, i32
  }
  func.func @transform_2(%arg0: i32, %arg1: i32) -> (i32, i32) {
    %c0_i32 = arith.constant 0 : i32
    %c0_i32_0 = arith.constant 0 : i32
    return %c0_i32, %arg0 : i32, i32
  }
}

</mosaic_0001>

<llo_original>
// kernel: global_readout.1
$region0: #{global_readout.1}
  #allocation0 [shape = 'u32[]', space=smem, size = 0x4, offset = 0x4, fixed_abs, tag = 'smem constant byte address 0x4 - core index']
  #allocation1 [shape = 'u32[144,128]{1,0:T(1,128)}', space=vmem, size = 0x12000, scoped, tag = 'internal scratch']
  #allocation2 [shape = 'f32[5,64]{1,0:T(8,128)}', space=vmem, size = 0x1000, scoped, tag = 'scratch operand']
  %s0 = inlined_call_operand.vmem [shape: s32[1,384], index: 0, kind: input, shape index: {}]
  %s1 = inlined_call_operand.vmem [shape: f32[300,64], index: 1, kind: input, shape index: {}]
  %s2 = inlined_call_operand.hbm [shape: f32[5,64], index: 2, kind: output, shape index: {}]
  %s3 = sld [smem:[#allocation0]]
  $region49: #{global_readout.1} parent=0
    _
  %s5 = ssub.s32 1, %s3
  %s6 = scalar_select 0, %s5, %s3
  $region1: #{global_readout.1} parent=0
    #allocation3 [shape = 'u8[4096]{0}', space=vmem, size = 0x1000, scoped, tag = 'output window, operand 0, single buffered']
    #allocation4 [shape = 's32[2]{0}', space=sflag, size = 0x8, scoped, tag = 'scoped memory for global_readout.1']
    %7 = vsyncpa [#allocation4], 0
    loop: start=0, step=1, limit=5
    $region2: #{global_readout.1} parent=1 // loop_pre_header
      _
    $region3: #{global_readout.1} parent=1 // loop_header
      %s9 = sphi 0, %s13
      %p10 = scmp.ge.s32.totalorder %s9, 5
      %s16 = sphi 0, %s28
      %s17 = sphi 0, %s24
      %s18 = sphi 0, %s16
      %s19 = sphi 0, %s17
      %s20 = sphi 0, %s18
      %s21 = sphi 0, %s19
      %s31 = sphi 0, %s33
      %s34 = sphi 0, %s31
      %s35 = sphi 0, %s34
      %s51 = sphi 0, %s35
      %s59 = sphi 0, %s61
      %s62 = sphi 0, %s59
      %s63 = sphi 0, %s62
      %s79 = sphi 0, %s63
      %s85 = sphi 0, %s87
      %s88 = sphi 0, %s85
      %s89 = sphi 0, %s88
      %s105 = sphi 0, %s89
    $region4: #{global_readout.1} parent=1 // loop_header_branch
      %12 = sbr.rel (%p10) target = $region8
    $region5: #{global_readout.1} parent=1 // loop_body
      %s14 = ssub.s32 %s9, 1
      %s15 = ssub.s32 %s9, 2
      %s22 = sadd.s32 1, %s17
      %p23 = scmp.ge.s32.totalorder %s22, 3
      %s24 = scalar_select %p23, 0, %s22
      %s25 = sadd.s32 1, %s16
      %s26 = scalar_select %p23, %s25, %s16
      %p27 = scmp.ge.s32.totalorder %s26, 1
      %s28 = scalar_select %p27, 0, %s26
      %s29 = ssub.s32 %s17, %s24
      %p30 = scmp.eq.s32.totalorder %s29, 0
      %s32 = sadd.s32 %s31, 1
      %s33 = scalar_select %p30, %s31, %s32
      %p36 = pneg %p30
      %p37 = scmp.eq.s32.totalorder %s9, 2
      %p38 = por %p36, %p37
      %p39 = scmp.ne.s32.totalorder %s31, %s34
      %p40 = scmp.eq.s32.totalorder %s9, 0
      %p41 = por %p39, %p40
      %p42 = scmp.ne.s32.totalorder %s31, %s34
      %p43 = scmp.eq.s32.totalorder %s14, 2
      %p44 = por %p42, %p43
      %p45 = scmp.ne.s32.totalorder %s34, %s35
      %p46 = scmp.eq.s32.totalorder %s14, 0
      %p47 = por %p45, %p46
      %p48 = scmp.ne.s32.totalorder %s34, %s35
      %p49 = scmp.eq.s32.totalorder %s15, 2
      %p50 = por %p48, %p49
      %p52 = scmp.ne.s32.totalorder %s35, %s51
      %p53 = scmp.eq.s32.totalorder %s15, 0
      %p54 = por %p52, %p53
      %s55 = ssub.s32 %s17, %s24
      %s56 = ssub.s32 %s16, %s28
      %s57 = sor.u32 %s55, %s56
      %p58 = scmp.eq.s32.totalorder %s57, 0
      %s60 = sadd.s32 %s59, 1
      %s61 = scalar_select %p58, %s59, %s60
      %p64 = pneg %p58
      %p65 = scmp.eq.s32.totalorder %s9, 2
      %p66 = por %p64, %p65
      %p67 = scmp.ne.s32.totalorder %s59, %s62
      %p68 = scmp.eq.s32.totalorder %s9, 0
      %p69 = por %p67, %p68
      %p70 = scmp.ne.s32.totalorder %s59, %s62
      %p71 = scmp.eq.s32.totalorder %s14, 2
      %p72 = por %p70, %p71
      %p73 = scmp.ne.s32.totalorder %s62, %s63
      %p74 = scmp.eq.s32.totalorder %s14, 0
      %p75 = por %p73, %p74
      %p76 = scmp.ne.s32.totalorder %s62, %s63
      %p77 = scmp.eq.s32.totalorder %s15, 2
      %p78 = por %p76, %p77
      %p80 = scmp.ne.s32.totalorder %s63, %s79
      %p81 = scmp.eq.s32.totalorder %s15, 0
      %p82 = por %p80, %p81
      %s83 = ssub.s32 %s16, %s28
      %p84 = scmp.eq.s32.totalorder %s83, 0
      %s86 = sadd.s32 %s85, 1
      %s87 = scalar_select %p84, %s85, %s86
      %p90 = pneg %p84
      %p91 = scmp.eq.s32.totalorder %s9, 2
      %p92 = por %p90, %p91
      %p93 = scmp.ne.s32.totalorder %s85, %s88
      %p94 = scmp.eq.s32.totalorder %s9, 0
      %p95 = por %p93, %p94
      %p96 = scmp.ne.s32.totalorder %s85, %s88
      %p97 = scmp.eq.s32.totalorder %s14, 2
      %p98 = por %p96, %p97
      %p99 = scmp.ne.s32.totalorder %s88, %s89
      %p100 = scmp.eq.s32.totalorder %s14, 0
      %p101 = por %p99, %p100
      %p102 = scmp.ne.s32.totalorder %s88, %s89
      %p103 = scmp.eq.s32.totalorder %s15, 2
      %p104 = por %p102, %p103
      %p106 = scmp.ne.s32.totalorder %s89, %s105
      %p107 = scmp.eq.s32.totalorder %s15, 0
      %p108 = por %p106, %p107
      %p109 = scmp.le.s32.totalorder 1, %s9
      %p110 = scmp.lt.s32.totalorder %s9, 4
      %p111 = pnand %p109, %p110
      %p112 = pneg %p111
      // Predicated region
      $region9: #{global_readout.1} parent=5 // pred_check
        _
      $region10: #{global_readout.1} parent=5 // pred_check_branch
        %114 = sbr.rel (%p111) target = $region12
      $region11: #{global_readout.1} parent=5 // pred_region
        %s115 = ssub.s32 %s9, 1
      $region12: #{global_readout.1} parent=5 // pred_fallthru
        _
      %p116 = scmp.lt.s32.totalorder %s9, 3
      // Predicated region
      $region13: #{global_readout.1} parent=5 // pred_check
        %p117 = pneg %p116
      $region14: #{global_readout.1} parent=5 // pred_check_branch
        %119 = sbr.rel (%p117) target = $region16
      $region15: #{global_readout.1} parent=5 // pred_region
        // Predicated region
        $region17: #{global_readout.1} parent=15 // pred_check
          %p120 = pneg %p41
        $region18: #{global_readout.1} parent=15 // pred_check_branch
          %122 = sbr.rel (%p120) target = $region20
        $region19: #{global_readout.1} parent=15 // pred_region
          %p123 = scmp.lt.s32.totalorder %s17, 2
          %s124 = scalar_select %p123, %s17, 2
          %s125 = scalar_lea.vmem %s0, %s124
        $region20: #{global_readout.1} parent=15 // pred_fallthru
          _
        // Predicated region
        $region21: #{global_readout.1} parent=15 // pred_check
          %p126 = pneg %p69
        $region22: #{global_readout.1} parent=15 // pred_check_branch
          %128 = sbr.rel (%p126) target = $region24
        $region23: #{global_readout.1} parent=15 // pred_region
          %s129 = smul.u32 16, %s17
          %s130 = ssub.s32 38, %s129
          %p131 = scmp.lt.s32.totalorder %s130, 16
          %s132 = scalar_select %p131, %s130, 16
          %s133 = smul.u32 128, %s132
          %p134 = scmp.lt.s32.totalorder %s129, 37
          %s135 = scalar_select %p134, %s129, 37
          %p136 = scmp.lt.s32.totalorder %s16, 0
          %s137 = scalar_select %p136, %s16, 0
          %s138 = sadd.s32 %s137, %s135
          %s139 = smul.addr %s138, 8
          %s140 = scalar_lea.vmem %s1, %s139
          %s141 = smul.u32 16, %s17
          %s142 = ssub.s32 38, %s141
          %p143 = scmp.lt.s32.totalorder %s142, 16
          %s144 = scalar_select %p143, %s142, 16
          %s145 = smul.u32 128, %s144
        $region24: #{global_readout.1} parent=15 // pred_fallthru
          _
      $region16: #{global_readout.1} parent=5 // pred_fallthru
        _
      %p146 = scmp.le.s32.totalorder 1, %s9
      %p147 = scmp.lt.s32.totalorder %s9, 4
      %p148 = pnand %p146, %p147
      %p149 = pneg %p148
      // Predicated region
      $region25: #{global_readout.1} parent=5 // pred_check
        _
      $region26: #{global_readout.1} parent=5 // pred_check_branch
        %151 = sbr.rel (%p148) target = $region28
      $region27: #{global_readout.1} parent=5 // pred_region
        %s152 = ssub.s32 %s9, 1
        %p153 = scmp.lt.s32.totalorder %s19, 2
        %s154 = scalar_select %p153, %s19, 2
        %s155 = scalar_lea.vmem %s0, %s154
        %p156 = pneg %p47
        %p157 = pneg %p44
        %s158 = smul.u32 16, %s19
        %s159 = ssub.s32 38, %s158
        %p160 = scmp.lt.s32.totalorder %s159, 16
        %s161 = scalar_select %p160, %s159, 16
        %s162 = smul.u32 128, %s161
        %p163 = scmp.lt.s32.totalorder %s158, 37
        %s164 = scalar_select %p163, %s158, 37
        %p165 = scmp.lt.s32.totalorder %s18, 0
        %s166 = scalar_select %p165, %s18, 0
        %s167 = sadd.s32 %s166, %s164
        %s168 = smul.addr %s167, 8
        %s169 = scalar_lea.vmem %s1, %s168
        %p170 = pneg %p75
        %p171 = pneg %p72
        %p172 = pneg %p101
        %p173 = pneg %p98
        %p174 = scmp.lt.s32.totalorder %s19, 2
        %s175 = scalar_select %p174, %s19, 2
        %s176 = scalar_lea.vmem %s0, %s175
        %s177 = smul.u32 16, %s19
        %s178 = ssub.s32 38, %s177
        %p179 = scmp.lt.s32.totalorder %s178, 16
        %s180 = scalar_select %p179, %s178, 16
        %s181 = smul.u32 128, %s180
        %p182 = scmp.lt.s32.totalorder %s177, 37
        %s183 = scalar_select %p182, %s177, 37
        %p184 = scmp.lt.s32.totalorder %s18, 0
        %s185 = scalar_select %p184, %s18, 0
        %s186 = sadd.s32 %s185, %s183
        %s187 = smul.addr %s186, 8
        %s188 = scalar_lea.vmem %s1, %s187
        %s189 = smul.u32 16, %s19
        %s190 = ssub.s32 38, %s189
        %p191 = scmp.lt.s32.totalorder %s190, 16
        %s192 = scalar_select %p191, %s190, 16
        %s193 = smul.u32 128, %s192
        %p194 = scmp.eq.s32.totalorder %s19, 0
        // Predicated region
        $region29: #{global_readout.1} parent=27 // pred_check
          %p195 = pneg %p194
        $region30: #{global_readout.1} parent=27 // pred_check_branch
          %197 = sbr.rel (%p195) target = $region32
        $region31: #{global_readout.1} parent=27 // pred_region
          %vm198 = vcmask 520192
          %199 = vst.msk [vmem:[#allocation2] sm:$0x1f] %vm198, 0.0
        $region32: #{global_readout.1} parent=27 // pred_fallthru
          _
        %v200 = vld [vmem:[%s176] sm:$0x1]
        %v201 = vld [vmem:[%s188] sm:$0xff]
        %v202 = vld [vmem:[%s188 + $0x8] sm:$0xff]
        %v203 = vld [vmem:[%s188 + $0x10] sm:$0xff]
        %v204 = vld [vmem:[%s188 + $0x18] sm:$0xff]
        %v205 = vld [vmem:[%s188 + $0x20] sm:$0xff]
        %v206 = vld [vmem:[%s188 + $0x28] sm:$0xff]
        %v207 = vld [vmem:[%s188 + $0x30] sm:$0xff]
        %v208 = vld [vmem:[%s188 + $0x38] sm:$0xff]
        %v209 = vld [vmem:[%s188 + $0x40] sm:$0xff]
        %v210 = vld [vmem:[%s188 + $0x48] sm:$0xff]
        %v211 = vld [vmem:[%s188 + $0x50] sm:$0xff]
        %v212 = vld [vmem:[%s188 + $0x58] sm:$0xff]
        %v213 = vld [vmem:[%s188 + $0x60] sm:$0xff]
        %v214 = vld [vmem:[%s188 + $0x68] sm:$0xff]
        %v215 = vld [vmem:[%s188 + $0x70] sm:$0xff]
        %v216 = vld [vmem:[%s188 + $0x78] sm:$0xff]
        %v217 = vlaneseq
        %v218 = vshrl.u32 %v217, 7
        %v219 = vadd.s32 %v218, 8
        %v220 = vadd.s32 %v218, 16
        %v221 = vadd.s32 %v218, 24
        %v222 = vadd.s32 %v218, 32
        %v223 = vadd.s32 %v218, 40
        %v224 = vadd.s32 %v218, 48
        %v225 = vadd.s32 %v218, 56
        %v226 = vadd.s32 %v218, 64
        %v227 = vadd.s32 %v218, 72
        %v228 = vadd.s32 %v218, 80
        %v229 = vadd.s32 %v218, 88
        %v230 = vadd.s32 %v218, 96
        %v231 = vadd.s32 %v218, 104
        %v232 = vadd.s32 %v218, 112
        %v233 = vadd.s32 %v218, 120
        %s234 = smul.u32 %s19, 128
        %v235 = vstv %s234
        %v236 = vadd.s32 %v218, %v235
        %v237 = vadd.s32 %v219, %v235
        %v238 = vadd.s32 %v220, %v235
        %v239 = vadd.s32 %v221, %v235
        %v240 = vadd.s32 %v222, %v235
        %v241 = vadd.s32 %v223, %v235
        %v242 = vadd.s32 %v224, %v235
        %v243 = vadd.s32 %v225, %v235
        %v244 = vadd.s32 %v226, %v235
        %v245 = vadd.s32 %v227, %v235
        %v246 = vadd.s32 %v228, %v235
        %v247 = vadd.s32 %v229, %v235
        %v248 = vadd.s32 %v230, %v235
        %v249 = vadd.s32 %v231, %v235
        %v250 = vadd.s32 %v232, %v235
        %v251 = vadd.s32 %v233, %v235
        %vm252 = vcmp.lt.s32.totalorder %v236, 300
        %vm253 = vcmp.lt.s32.totalorder %v237, 300
        %vm254 = vcmp.lt.s32.totalorder %v238, 300
        %vm255 = vcmp.lt.s32.totalorder %v239, 300
        %vm256 = vcmp.lt.s32.totalorder %v240, 300
        %vm257 = vcmp.lt.s32.totalorder %v241, 300
        %vm258 = vcmp.lt.s32.totalorder %v242, 300
        %vm259 = vcmp.lt.s32.totalorder %v243, 300
        %vm260 = vcmp.lt.s32.totalorder %v244, 300
        %vm261 = vcmp.lt.s32.totalorder %v245, 300
        %vm262 = vcmp.lt.s32.totalorder %v246, 300
        %vm263 = vcmp.lt.s32.totalorder %v247, 300
        %vm264 = vcmp.lt.s32.totalorder %v248, 300
        %vm265 = vcmp.lt.s32.totalorder %v249, 300
        %vm266 = vcmp.lt.s32.totalorder %v250, 300
        %vm267 = vcmp.lt.s32.totalorder %v251, 300
        %v268 = vsel %vm252, 1, 0
        %v269 = vsel %vm253, 1, 0
        %v270 = vsel %vm254, 1, 0
        %v271 = vsel %vm255, 1, 0
        %v272 = vsel %vm256, 1, 0
        %v273 = vsel %vm257, 1, 0
        %v274 = vsel %vm258, 1, 0
        %v275 = vsel %vm259, 1, 0
        %v276 = vsel %vm260, 1, 0
        %v277 = vsel %vm261, 1, 0
        %v278 = vsel %vm262, 1, 0
        %v279 = vsel %vm263, 1, 0
        %v280 = vsel %vm264, 1, 0
        %v281 = vsel %vm265, 1, 0
        %v282 = vsel %vm266, 1, 0
        %v283 = vsel %vm267, 1, 0
        %vm284 = vcmp.eq.s32.totalorder %v268, 1
        %vm285 = vcmp.eq.s32.totalorder %v269, 1
        %vm286 = vcmp.eq.s32.totalorder %v270, 1
        %vm287 = vcmp.eq.s32.totalorder %v271, 1
        %vm288 = vcmp.eq.s32.totalorder %v272, 1
        %vm289 = vcmp.eq.s32.totalorder %v273, 1
        %vm290 = vcmp.eq.s32.totalorder %v274, 1
        %vm291 = vcmp.eq.s32.totalorder %v275, 1
        %vm292 = vcmp.eq.s32.totalorder %v276, 1
        %vm293 = vcmp.eq.s32.totalorder %v277, 1
        %vm294 = vcmp.eq.s32.totalorder %v278, 1
        %vm295 = vcmp.eq.s32.totalorder %v279, 1
        %vm296 = vcmp.eq.s32.totalorder %v280, 1
        %vm297 = vcmp.eq.s32.totalorder %v281, 1
        %vm298 = vcmp.eq.s32.totalorder %v282, 1
        %vm299 = vcmp.eq.s32.totalorder %v283, 1
        %v300 = vsel %vm284, %v201, 0.0
        %v301 = vsel %vm285, %v202, 0.0
        %v302 = vsel %vm286, %v203, 0.0
        %v303 = vsel %vm287, %v204, 0.0
        %v304 = vsel %vm288, %v205, 0.0
        %v305 = vsel %vm289, %v206, 0.0
        %v306 = vsel %vm290, %v207, 0.0
        %v307 = vsel %vm291, %v208, 0.0
        %v308 = vsel %vm292, %v209, 0.0
        %v309 = vsel %vm293, %v210, 0.0
        %v310 = vsel %vm294, %v211, 0.0
        %v311 = vsel %vm295, %v212, 0.0
        %v312 = vsel %vm296, %v213, 0.0
        %v313 = vsel %vm297, %v214, 0.0
        %v314 = vsel %vm298, %v215, 0.0
        %v315 = vsel %vm299, %v216, 0.0
        %v316 = vlaneseq
        %v317 = vshrl.u32 %v316, 7
        %v318 = vsub.s32 0, %v317
        %v319 = vrot.slane %v200, %v318
        %vm320 = vcmp.eq.s32.totalorder %v218, %v319
        %v321 = vsel %vm320, 1, 0
        %v322 = vcvt.s32.f32 %v321
        %v323 = vld [vmem:[#allocation2] sm:$0x1f]
        %324 = vmatprep.subr.mxu0 0.0
        %325 = vmatpush1.msra.mxu0 %v315
        %326 = vmatprep.subr.mxu0 0.0
        %327 = vmatpush1.msra.mxu0 %v314
        %328 = vmatprep.subr.mxu0 0.0
        %329 = vmatpush1.msra.mxu0 %v313
        %330 = vmatprep.subr.mxu0 0.0
        %331 = vmatpush1.msra.mxu0 %v312
        %332 = vmatprep.subr.mxu0 0.0
        %333 = vmatpush1.msra.mxu0 %v311
        %334 = vmatprep.subr.mxu0 0.0
        %335 = vmatpush1.msra.mxu0 %v310
        %336 = vmatprep.subr.mxu0 0.0
        %337 = vmatpush1.msra.mxu0 %v309
        %338 = vmatprep.subr.mxu0 0.0
        %339 = vmatpush1.msra.mxu0 %v308
        %340 = vmatprep.subr.mxu0 0.0
        %341 = vmatpush1.msra.mxu0 %v307
        %342 = vmatprep.subr.mxu0 0.0
        %343 = vmatpush1.msra.mxu0 %v306
        %344 = vmatprep.subr.mxu0 0.0
        %345 = vmatpush1.msra.mxu0 %v305
        %346 = vmatprep.subr.mxu0 0.0
        %347 = vmatpush1.msra.mxu0 %v304
        %348 = vmatprep.subr.mxu0 0.0
        %349 = vmatpush1.msra.mxu0 %v303
        %350 = vmatprep.subr.mxu0 0.0
        %351 = vmatpush1.msra.mxu0 %v302
        %352 = vmatprep.subr.mxu0 0.0
        %353 = vmatpush1.msra.mxu0 %v301
        %354 = vmatprep.subr.mxu0 0.0
        %355 = vmatpush1.msra.mxu0 %v300
        %356 = vmatprep.subr.mxu0 0.0
        %357 = vmatpush2.msra.mxu0 0.0
        %358 = vmatprep.subr.mxu0 0.0
        %359 = vmatpush2.msra.mxu0 0.0
        %360 = vmatprep.subr.mxu0 0.0
        %361 = vmatpush2.msra.mxu0 0.0
        %362 = vmatprep.subr.mxu0 0.0
        %363 = vmatpush2.msra.mxu0 0.0
        %364 = vmatprep.subr.mxu0 0.0
        %365 = vmatpush2.msra.mxu0 0.0
        %366 = vmatprep.subr.mxu0 0.0
        %367 = vmatpush2.msra.mxu0 0.0
        %368 = vmatprep.subr.mxu0 0.0
        %369 = vmatpush2.msra.mxu0 0.0
        %370 = vmatprep.subr.mxu0 0.0
        %371 = vmatpush2.msra.mxu0 0.0
        %372 = vmatprep.subr.mxu0 0.0
        %373 = vmatpush2.msra.mxu0 0.0
        %374 = vmatprep.subr.mxu0 0.0
        %375 = vmatpush2.msra.mxu0 0.0
        %376 = vmatprep.subr.mxu0 0.0
        %377 = vmatpush2.msra.mxu0 0.0
        %378 = vmatprep.subr.mxu0 0.0
        %379 = vmatpush2.msra.mxu0 0.0
        %380 = vmatprep.subr.mxu0 0.0
        %381 = vmatpush2.msra.mxu0 0.0
        %382 = vmatprep.subr.mxu0 0.0
        %383 = vmatpush2.msra.mxu0 0.0
        %384 = vmatprep.subr.mxu0 0.0
        %385 = vmatpush2.msra.mxu0 0.0
        %386 = vmatprep.subr.mxu0 0.0
        %387 = vmatpush2.msra.mxu0 0.0
        %388 = vmatprep.mubr.f32.mxu0 0.0
        %389 = vmatmul.mubr.f32.gmra.mxu0 %v322
        %v390 = vpop.f32.mrf.mxu0
        %v391 = vadd.f32 0.0, %v390
        %v392 = vpop.f32.mrf.mxu0
        %393 = vdwg.mxu0
        %v394 = vadd.f32 %v323, %v391
        %vm395 = vcmask 520192
        %396 = vst.msk [vmem:[#allocation2] sm:$0x1f] %vm395, %v394
        %p397 = scmp.eq.s32.totalorder %s19, 2
        // Predicated region
        $region33: #{global_readout.1} parent=27 // pred_check
          %p398 = pneg %p397
        $region34: #{global_readout.1} parent=27 // pred_check_branch
          %400 = sbr.rel (%p398) target = $region36
        $region35: #{global_readout.1} parent=27 // pred_region
          %v401 = vld [vmem:[#allocation2] sm:$0x1f]
          %402 = vst.msk [vmem:[#allocation3] sm:$0x1f] %vm395, %v401
        $region36: #{global_readout.1} parent=27 // pred_fallthru
          _
        // Predicated region
        $region37: #{global_readout.1} parent=27 // pred_check
          %p403 = pneg %p98
        $region38: #{global_readout.1} parent=27 // pred_check_branch
          %405 = sbr.rel (%p403) target = $region40
        $region39: #{global_readout.1} parent=27 // pred_region
          %s407 = ssub.s32 128, 128
          %408 = vsyncadd [#allocation4], %s407
          %s409 = smul.addr %s18, 128
          %s410 = scalar_lea.hbm %s2, %s409
          %s412 = sshll.u32 [#allocation3], 4
          %s413 = int_to_ptr.vmem [resolvable:$true] %s412
          %415 = dma.vmem_to_hbm [thread:$0]  %s413, 128, %s410, [#allocation4]
        $region40: #{global_readout.1} parent=27 // pred_fallthru
          _
        // Predicated region
        $region41: #{global_readout.1} parent=27 // pred_check
          %p416 = pneg %p98
        $region42: #{global_readout.1} parent=27 // pred_check_branch
          %418 = sbr.rel (%p416) target = $region44
        $region43: #{global_readout.1} parent=27 // pred_region
          %419 = dma.done [#allocation4], 128
        $region44: #{global_readout.1} parent=27 // pred_fallthru
          _
      $region28: #{global_readout.1} parent=5 // pred_fallthru
        _
      %p420 = scmp.le.s32.totalorder 2, %s9
      // Predicated region
      $region45: #{global_readout.1} parent=5 // pred_check
        %p421 = pneg %p420
      $region46: #{global_readout.1} parent=5 // pred_check_branch
        %423 = sbr.rel (%p421) target = $region48
      $region47: #{global_readout.1} parent=5 // pred_region
        %s424 = ssub.s32 %s9, 2
      $region48: #{global_readout.1} parent=5 // pred_fallthru
        _
    $region6: #{global_readout.1} parent=1 // loop_footer
      %s13 = sadd.s32 1, %s9
    $region7: #{global_readout.1} parent=1 // loop_footer_branch
      %8 = sbr.rel target = $region3
    $region8: #{global_readout.1} parent=1 // loop_exit
      _
    %425 = vsyncpa [#allocation4], 1
    %s426 = scalar_lea.sflag [#allocation4], 1
    %427 = vsyncpa %s426, 1

</llo_original>
